<compile_context>
chip_gen: v5e
topology: v5e:2x2
jax: 0.10.0
libtpu: 0.0.40
codegen_flags: <defaults>
</compile_context>

<pallas_src>
import jax
import jax.numpy as jnp
from jax.experimental import pallas as pl
from jax.experimental.pallas import tpu as pltpu


def _scale_bias_kernel(h_ref, b_ref, x_ref, o_ref):
    # h_ref / b_ref: (1,) scalar params in SMEM; x_ref / o_ref: VMEM tiles.
    h = h_ref[0]
    b = b_ref[0]
    o_ref[...] = h * x_ref[...] + b


def linear_model_forward(x, h, b, *, lane=1024, max_block_rows=512):
    """y = h * x + b, elementwise.  x: any float array.  h, b: shape (1,)."""
    orig_shape = x.shape
    orig_dtype = x.dtype
    n = x.size

    # Flatten to a wide, lane-dense 2D slab (rows, lane).  lane is a large
    # multiple of 128 so loads/stores are full-width and DMA descriptors are
    # big and contiguous.  Pad only the final partial row (<= lane-1 elems).
    n_pad = pl.cdiv(n, lane) * lane
    x_flat = jnp.ravel(x)
    padded = n_pad != n
    if padded:
        x_flat = jnp.concatenate(
            [x_flat, jnp.zeros((n_pad - n,), dtype=orig_dtype)]
        )
    rows = n_pad // lane
    x2d = x_flat.reshape(rows, lane)

    # Block sizing: ~2 MiB f32 blocks (512 x 1024).  Small inputs take the
    # whole slab as a single block (block dims == full array dims, which
    # satisfies the (8, 128) tiling rule even for odd row counts).
    block_rows = rows if rows <= max_block_rows else max_block_rows
    grid = (pl.cdiv(rows, block_rows),)

    out2d = pl.pallas_call(
        _scale_bias_kernel,
        out_shape=jax.ShapeDtypeStruct((rows, lane), orig_dtype),
        grid_spec=pltpu.PrefetchScalarGridSpec(
            num_scalar_prefetch=0,
            grid=grid,
            in_specs=[
                pl.BlockSpec(memory_space=pltpu.SMEM),  # h (1,)
                pl.BlockSpec(memory_space=pltpu.SMEM),  # b (1,)
                pl.BlockSpec((block_rows, lane), lambda i: (i, 0)),
            ],
            out_specs=pl.BlockSpec((block_rows, lane), lambda i: (i, 0)),
        ),
        compiler_params=pltpu.CompilerParams(
            dimension_semantics=("parallel",),
        ),
    )(h, b, x2d)

    if padded:
        return out2d.reshape(-1)[:n].reshape(orig_shape)
    return out2d.reshape(orig_shape)


if __name__ == "__main__":
    key = jax.random.PRNGKey(0)
    kx, kh, kb = jax.random.split(key, 3)

    # Small NCHW input consistent with the elementwise forward.
    x = jax.random.normal(kx, (2, 4, 16, 16), dtype=jnp.float32)

    # PyTorch inits h, b to zeros; use nonzero deterministic values so the
    # kernel's scale+bias path is actually exercised.
    h = jax.random.normal(kh, (1,), dtype=jnp.float32)
    b = jax.random.normal(kb, (1,), dtype=jnp.float32)

    y = linear_model_forward(x, h, b)
    y = jax.block_until_ready(y)

    # Reference check in plain JAX.
    y_ref = h[0] * x + b[0]
    assert y.shape == x.shape
    assert jnp.allclose(y, y_ref, atol=1e-6, rtol=1e-6)

    print("KERNEL_OK")
</pallas_src>

<mosaic_0001>
module attributes {stable_mosaic.version = 11 : i64} {
  func.func @_scale_bias_kernel(%arg0: i32, %arg1: memref<1xf32, #tpu.memory_space<smem>>, %arg2: memref<1xf32, #tpu.memory_space<smem>>, %arg3: memref<2x1024xf32, #tpu.memory_space<vmem>>, %arg4: memref<2x1024xf32, #tpu.memory_space<vmem>>) attributes {dimension_semantics = [#tpu.dimension_semantics<parallel>], iteration_bounds = array<i64: 1>, scalar_prefetch = 0 : i64, scratch_operands = 0 : i64, tpu.core_type = #tpu.core_type<tc>, window_params = [{transform_indices = @transform_0, window_bounds = array<i64: 1>}, {transform_indices = @transform_1, window_bounds = array<i64: 1>}, {transform_indices = @transform_2, window_bounds = array<i64: 2, 1024>}, {transform_indices = @transform_3, window_bounds = array<i64: 2, 1024>}]} {
    %c0 = arith.constant 0 : index
    %0 = memref.load %arg1[%c0] : memref<1xf32, #tpu.memory_space<smem>>
    %c0_0 = arith.constant 0 : index
    %1 = memref.load %arg2[%c0_0] : memref<1xf32, #tpu.memory_space<smem>>
    %c0_1 = arith.constant 0 : index
    %c0_2 = arith.constant 0 : index
    %2 = vector.load %arg3[%c0_1, %c0_2] : memref<2x1024xf32, #tpu.memory_space<vmem>>, vector<2x1024xf32>
    %3 = vector.broadcast %0 : f32 to vector<2x1024xf32>
    %4 = arith.mulf %3, %2 : vector<2x1024xf32>
    %5 = vector.broadcast %1 : f32 to vector<2x1024xf32>
    %6 = arith.addf %4, %5 : vector<2x1024xf32>
    %c0_3 = arith.constant 0 : index
    %c0_4 = arith.constant 0 : index
    %7 = vector.load %arg4[%c0_3, %c0_4] : memref<2x1024xf32, #tpu.memory_space<vmem>>, vector<2x1024xf32>
    tpu.vector_store %arg4[%c0_3, %c0_4], %6 {strides = array<i32>} : memref<2x1024xf32, #tpu.memory_space<vmem>>, vector<2x1024xf32>,
    return
  }
  func.func @transform_0(%arg0: i32) -> i32 {
    %c0_i32 = arith.constant 0 : i32
    %c0_i32_0 = arith.constant 0 : i32
    return %c0_i32 : i32
  }
  func.func @transform_1(%arg0: i32) -> i32 {
    %c0_i32 = arith.constant 0 : i32
    %c0_i32_0 = arith.constant 0 : i32
    return %c0_i32 : i32
  }
  func.func @transform_2(%arg0: i32) -> (i32, i32) {
    %c0_i32 = arith.constant 0 : i32
    %c0_i32_0 = arith.constant 0 : i32
    return %arg0, %c0_i32 : i32, i32
  }
  func.func @transform_3(%arg0: i32) -> (i32, i32) {
    %c0_i32 = arith.constant 0 : i32
    %c0_i32_0 = arith.constant 0 : i32
    return %arg0, %c0_i32 : i32, i32
  }
}

</mosaic_0001>

<llo_original>
// kernel: tpu_custom_call.1
$region0: #{tpu_custom_call.1}
  #allocation0 [shape = 'u32[]', space=smem, size = 0x4, offset = 0x4, fixed_abs, tag = 'smem constant byte address 0x4 - core index']
  #allocation1 [shape = 'u32[72,128]{1,0:T(1,128)}', space=vmem, size = 0x9000, scoped, tag = 'internal scratch']
  #allocation2 [shape = 'f32[1]{0:T(128)S(6)}', space=smem, size = 0x200, scoped, tag = 'scoped memory for tpu_custom_call.1']
  #allocation3 [shape = 'f32[1]{0:T(128)S(6)}', space=smem, size = 0x200, scoped, tag = 'scoped memory for tpu_custom_call.1']
  %s0 = inlined_call_operand.<no memory space> [shape: f32[1], index: 0, kind: input, shape index: {}]
  %s1 = inlined_call_operand.<no memory space> [shape: f32[1], index: 1, kind: input, shape index: {}]
  %s2 = inlined_call_operand.hbm [shape: f32[2,1024], index: 2, kind: input, shape index: {}]
  %s3 = inlined_call_operand.hbm [shape: f32[2,1024], index: 3, kind: output, shape index: {}]
  %s4 = sld [smem:[#allocation0]]
  $region26: #{tpu_custom_call.1} parent=0
    _
  %s6 = ssub.s32 1, %s4
  %s7 = scalar_select 0, %s6, %s4
  %8 = sst [smem:[#allocation2]] %s0
  %9 = sst [smem:[#allocation3]] %s1
  $region1: #{tpu_custom_call.1} parent=0
    #allocation4 [shape = 'u8[8192]{0}', space=vmem, size = 0x2000, scoped, tag = 'input window, operand 2, single buffered']
    #allocation5 [shape = 's32[1]{0}', space=sflag, size = 0x4, scoped, tag = 'scoped memory for tpu_custom_call.1']
    #allocation6 [shape = 's32[1]{0}', space=sflag, size = 0x4, scoped, tag = 'scoped memory for tpu_custom_call.1']
    #allocation7 [shape = 'u8[8192]{0}', space=vmem, size = 0x2000, scoped, tag = 'output window, operand 0, single buffered']
    %10 = vsyncpa [#allocation5], 0
    %11 = vsyncpa [#allocation6], 0
    // Predicated region
    $region2: #{tpu_custom_call.1} parent=1 // pred_check
      _
    $region3: #{tpu_custom_call.1} parent=1 // pred_check_branch
      %13 = sbr.rel (0) target = $region5
    $region4: #{tpu_custom_call.1} parent=1 // pred_region
      _
    $region5: #{tpu_custom_call.1} parent=1 // pred_fallthru
      _
    // Predicated region
    $region6: #{tpu_custom_call.1} parent=1 // pred_check
      _
    $region7: #{tpu_custom_call.1} parent=1 // pred_check_branch
      %15 = sbr.rel (0) target = $region9
    $region8: #{tpu_custom_call.1} parent=1 // pred_region
      _
    $region9: #{tpu_custom_call.1} parent=1 // pred_fallthru
      _
    // Predicated region
    $region10: #{tpu_custom_call.1} parent=1 // pred_check
      _
    $region11: #{tpu_custom_call.1} parent=1 // pred_check_branch
      %17 = sbr.rel (0) target = $region13
    $region12: #{tpu_custom_call.1} parent=1 // pred_region
      %19 = vsyncadd [#allocation5], 0
      %s21 = sshll.u32 %s2, 4
      %s22 = int_to_ptr.hbm [resolvable:$true] %s21
      %s23 = sshll.u32 [#allocation4], 4
      %s24 = int_to_ptr.vmem [resolvable:$true] %s23
      %26 = dma.hbm_to_vmem [thread:$0]  %s22, 256, %s24, [#allocation5]
    $region13: #{tpu_custom_call.1} parent=1 // pred_fallthru
      _
    // Predicated region
    $region14: #{tpu_custom_call.1} parent=1 // pred_check
      _
    $region15: #{tpu_custom_call.1} parent=1 // pred_check_branch
      %28 = sbr.rel (0) target = $region17
    $region16: #{tpu_custom_call.1} parent=1 // pred_region
      %30 = dma.done [#allocation5], 256
    $region17: #{tpu_custom_call.1} parent=1 // pred_fallthru
      _
    %s31 = sld [smem:[#allocation2]]
    %s32 = sld [smem:[#allocation3]]
    %v33 = vld [vmem:[#allocation4] sm:$0xff]
    %v34 = vld [vmem:[#allocation4 + $0x8] sm:$0xff]
    %v35 = vstv %s31
    %v36 = vmul.f32 %v35, %v33
    %v37 = vmul.f32 %v35, %v34
    %v38 = vstv %s32
    %v39 = vadd.f32 %v36, %v38
    %v40 = vadd.f32 %v37, %v38
    %41 = vst [vmem:[#allocation7] sm:$0xff] %v39
    %42 = vst [vmem:[#allocation7 + $0x8] sm:$0xff] %v40
    // Predicated region
    $region18: #{tpu_custom_call.1} parent=1 // pred_check
      _
    $region19: #{tpu_custom_call.1} parent=1 // pred_check_branch
      %44 = sbr.rel (0) target = $region21
    $region20: #{tpu_custom_call.1} parent=1 // pred_region
      %46 = vsyncadd [#allocation6], 0
      %s48 = sshll.u32 [#allocation7], 4
      %s49 = int_to_ptr.vmem [resolvable:$true] %s48
      %s50 = sshll.u32 %s3, 4
      %s51 = int_to_ptr.hbm [resolvable:$true] %s50
      %53 = dma.vmem_to_hbm [thread:$0]  %s49, 256, %s51, [#allocation6]
    $region21: #{tpu_custom_call.1} parent=1 // pred_fallthru
      _
    // Predicated region
    $region22: #{tpu_custom_call.1} parent=1 // pred_check
      _
    $region23: #{tpu_custom_call.1} parent=1 // pred_check_branch
      %55 = sbr.rel (0) target = $region25
    $region24: #{tpu_custom_call.1} parent=1 // pred_region
      %57 = dma.done [#allocation6], 256
    $region25: #{tpu_custom_call.1} parent=1 // pred_fallthru
      _
    %58 = vsyncpa [#allocation5], 1
    %59 = vsyncpa [#allocation6], 1

</llo_original>
